<compile_context>
chip_gen: v6e
topology: v6e:2x2x1
jax: 0.10.0
libtpu: 0.0.40
codegen_flags: <defaults>
</compile_context>

<pallas_src>
import jax
import jax.numpy as jnp
from jax import lax
from jax.experimental import pallas as pl
from jax.experimental.pallas import tpu as pltpu

HIDDEN = 50          # per-net hidden width (PyTorch spec)
N_LAYERS = 6         # per net: 1->50, (50->50) x4, 50->1
N_HIDDEN = 4         # number of 50->50 hidden layers per net
PAD = 64             # per-net padded hidden width
FUSED = 2 * PAD      # fused hidden width = 128 (full lane width)
MAX_TILE_B = 2048    # tile cap for very large collocation batches


def _round_up(n, m):
    return ((n + m - 1) // m) * m


def _choose_tiling(batch):
    """Pick (tile, grid) for the batch axis.

    * pad only to a multiple of 8 (sublane granularity), never to 256;
    * use >= 2 grid steps whenever B > 8 so v7x's two TensorCores both get
      work under dimension_semantics=("parallel",);
    * cap the tile for huge batches (amortizes the ~0.35 us per-step cost
      while per-step VMEM stays tiny).
    """
    b8 = _round_up(batch, 8)
    if b8 <= 8:
        return b8, 1
    tile = min(_round_up(pl.cdiv(b8, 2), 8), MAX_TILE_B)
    grid = pl.cdiv(b8, tile)
    return tile, grid


# ----------------------------------------------------------------------------
# Kernel
# ----------------------------------------------------------------------------
def _pinn_kernel(xc_ref, xr_ref, wf_ref, bf_ref, wh_ref, bh_ref, wl_ref, bl_ref,
                 out_ref):
    """Fused block-diagonal PINN forward for one batch tile.

    xc_ref: (T, 1)             input points, column layout (for the first layer)
    xr_ref: (1, 1, T)          same points, lane-dense row layout (for x*(1-x))
    wf_ref: (1, 128)           fused first-layer weights (row)
    bf_ref: (1, 128)           fused first-layer bias
    wh_ref: (4, 128, 128)      block-diagonal hidden weights
    bh_ref: (4, 1, 128)        fused hidden biases
    wl_ref: (2, 128)           fused last-layer weights, transposed (row0=u, row1=q)
    bl_ref: (2, 1)             fused last-layer bias
    out_ref:(1, 2, T)          row 0 = u * x * (1 - x), row 1 = q  (lane-dense)
    """
    x = xc_ref[...]                                           # (T, 1) f32

    # First layer: K=1 contraction -> broadcast multiply-add on the VPU.
    h = jnp.tanh(x * wf_ref[...] + bf_ref[...])               # (T, 128)

    # Four fused block-diagonal 128x128 hidden layers (MXU) + tanh (EUP).
    # Kept f32 end-to-end (PINN precision; see header note).
    for i in range(N_HIDDEN):
        h = jnp.tanh(
            jnp.dot(h, wh_ref[i], preferred_element_type=jnp.float32)
            + bh_ref[i]
        )

    # Fused, lane-dense final layer: (2,128) . (T,128)^T -> (2, T).
    out = lax.dot_general(
        wl_ref[...], h,
        dimension_numbers=(((1,), (1,)), ((), ())),
        preferred_element_type=jnp.float32,
    ) + bl_ref[...]                                           # (2, T)

    # Apply the boundary factor x*(1-x) to the u row (row 0) only.
    xr = xr_ref[0]                                            # (1, T)
    factor = xr * (1.0 - xr)                                  # (1, T)
    row = lax.broadcasted_iota(jnp.int32, out.shape, 0)       # (2, T)
    out_ref[0] = jnp.where(row == 0, out * factor, out).astype(out_ref.dtype)


# ----------------------------------------------------------------------------
# Parameter construction / packing
# ----------------------------------------------------------------------------
def init_params(key):
    """Deterministic per-net parameters (same shapes as the PyTorch module),
    stored as (in, out) weights and (1, out) bias rows."""
    dims = [1, HIDDEN, HIDDEN, HIDDEN, HIDDEN, HIDDEN, 1]

    def one_net(k):
        ws, bs = [], []
        for i in range(N_LAYERS):
            k, kw, kb = jax.random.split(k, 3)
            bound = 1.0 / jnp.sqrt(jnp.float32(dims[i]))
            ws.append(
                jax.random.uniform(
                    kw, (dims[i], dims[i + 1]), jnp.float32, -bound, bound
                )
            )
            bs.append(
                jax.random.uniform(kb, (1, dims[i + 1]), jnp.float32, -bound, bound)
            )
        return ws, bs

    ku, kq = jax.random.split(key)
    wu, bu = one_net(ku)
    wq, bq = one_net(kq)
    return wu, bu, wq, bq


def pack_params(wu, bu, wq, bq):
    """Pack the two 50-wide nets into one 128-wide block-diagonal net."""
    # First layer: (1, 50) x2 -> (1, 128)
    w_first = jnp.zeros((1, FUSED), jnp.float32)
    w_first = w_first.at[:, :HIDDEN].set(wu[0])
    w_first = w_first.at[:, PAD:PAD + HIDDEN].set(wq[0])
    b_first = jnp.zeros((1, FUSED), jnp.float32)
    b_first = b_first.at[:, :HIDDEN].set(bu[0])
    b_first = b_first.at[:, PAD:PAD + HIDDEN].set(bq[0])

    # Hidden layers: (50, 50) x2 per layer -> block-diagonal (128, 128)
    w_hidden = jnp.zeros((N_HIDDEN, FUSED, FUSED), jnp.float32)
    b_hidden = jnp.zeros((N_HIDDEN, 1, FUSED), jnp.float32)
    for i in range(N_HIDDEN):
        w_hidden = w_hidden.at[i, :HIDDEN, :HIDDEN].set(wu[i + 1])
        w_hidden = w_hidden.at[i, PAD:PAD + HIDDEN, PAD:PAD + HIDDEN].set(wq[i + 1])
        b_hidden = b_hidden.at[i, 0, :HIDDEN].set(bu[i + 1][0])
        b_hidden = b_hidden.at[i, 0, PAD:PAD + HIDDEN].set(bq[i + 1][0])

    # Last layer, stored transposed for the lane-dense epilogue:
    # (2, 128) with row 0 = u head, row 1 = q head; bias (2, 1).
    w_last_t = jnp.zeros((2, FUSED), jnp.float32)
    w_last_t = w_last_t.at[0, :HIDDEN].set(wu[N_LAYERS - 1][:, 0])
    w_last_t = w_last_t.at[1, PAD:PAD + HIDDEN].set(wq[N_LAYERS - 1][:, 0])
    b_last_t = jnp.zeros((2, 1), jnp.float32)
    b_last_t = b_last_t.at[0, 0].set(bu[N_LAYERS - 1][0, 0])
    b_last_t = b_last_t.at[1, 0].set(bq[N_LAYERS - 1][0, 0])

    return w_first, b_first, w_hidden, b_hidden, w_last_t, b_last_t


# ----------------------------------------------------------------------------
# Wrapper
# ----------------------------------------------------------------------------
@jax.jit
def neural_network_forward(x, w_first, b_first, w_hidden, b_hidden, w_last_t,
                           b_last_t):
    """Pallas forward: returns (u(x) * x * (1 - x), q(x)), each (B, 1) f32."""
    B = x.shape[0]
    tile, grid = _choose_tiling(B)
    bp = tile * grid

    x_col = jnp.zeros((bp, 1), jnp.float32).at[:B].set(x.astype(jnp.float32))
    # Same points as one lane-dense (1, tile) row per grid step, used in-kernel
    # to apply x*(1-x) to row 0 of the (2, tile) output.
    x_row = x_col.reshape(grid, 1, tile)

    out = pl.pallas_call(
        _pinn_kernel,
        out_shape=jax.ShapeDtypeStruct((grid, 2, tile), jnp.float32),
        grid_spec=pltpu.PrefetchScalarGridSpec(
            num_scalar_prefetch=0,
            grid=(grid,),
            in_specs=[
                pl.BlockSpec((tile, 1), lambda i: (i, 0)),           # x column tile
                pl.BlockSpec((1, 1, tile), lambda i: (i, 0, 0)),     # x row tile
                # Grid-invariant weights/biases: constant index maps keep them
                # resident in VMEM across steps (no re-DMA per grid step).
                pl.BlockSpec((1, FUSED), lambda i: (0, 0)),          # w_first
                pl.BlockSpec((1, FUSED), lambda i: (0, 0)),          # b_first
                pl.BlockSpec((N_HIDDEN, FUSED, FUSED), lambda i: (0, 0, 0)),
                pl.BlockSpec((N_HIDDEN, 1, FUSED), lambda i: (0, 0, 0)),
                pl.BlockSpec((2, FUSED), lambda i: (0, 0)),          # w_last_t
                pl.BlockSpec((2, 1), lambda i: (0, 0)),              # b_last_t
            ],
            out_specs=pl.BlockSpec((1, 2, tile), lambda i: (i, 0, 0)),
        ),
        compiler_params=pltpu.CompilerParams(
            dimension_semantics=("parallel",),
        ),
    )(x_col, x_row, w_first, b_first, w_hidden, b_hidden, w_last_t, b_last_t)

    out_u = out[:, 0, :].reshape(-1)[:B, None]
    out_q = out[:, 1, :].reshape(-1)[:B, None]
    return out_u, out_q


# ----------------------------------------------------------------------------
# Plain-JAX reference (mirrors the PyTorch forward exactly)
# ----------------------------------------------------------------------------
def _reference_forward(x, wu, bu, wq, bq):
    def mlp(h, ws, bs):
        for i in range(N_LAYERS - 1):
            h = jnp.tanh(h @ ws[i] + bs[i])
        return h @ ws[N_LAYERS - 1] + bs[N_LAYERS - 1]

    u = mlp(x, wu, bu) * x * (1.0 - x)
    q = mlp(x, wq, bq)
    return u, q


if __name__ == "__main__":
    key = jax.random.PRNGKey(0)
    kp, _ = jax.random.split(key)

    wu, bu, wq, bq = init_params(kp)
    fused = pack_params(wu, bu, wq, bq)

    # Input: n = N + 1 = 101 uniform points in [0, 1], shape (101, 1),
    # matching domain.uniform_points(n) in the original script.
    B = 101
    x = jnp.linspace(0.0, 1.0, B, dtype=jnp.float32)[:, None]

    out_u, out_q = neural_network_forward(x, *fused)
    jax.block_until_ready((out_u, out_q))

    ref_u, ref_q = _reference_forward(x, wu, bu, wq, bq)
    assert out_u.shape == (B, 1) and out_q.shape == (B, 1)
    assert jnp.allclose(out_u, ref_u, atol=1e-4, rtol=1e-4)
    assert jnp.allclose(out_q, ref_q, atol=1e-4, rtol=1e-4)

    print("KERNEL_OK")
</pallas_src>

<mosaic_0001>
module attributes {stable_mosaic.version = 11 : i64} {
  func.func @_pinn_kernel(%arg0: i32, %arg1: memref<56x1xf32, #tpu.memory_space<vmem>>, %arg2: memref<1x1x56xf32, #tpu.memory_space<vmem>>, %arg3: memref<1x128xf32, #tpu.memory_space<vmem>>, %arg4: memref<1x128xf32, #tpu.memory_space<vmem>>, %arg5: memref<4x128x128xf32, #tpu.memory_space<vmem>>, %arg6: memref<4x1x128xf32, #tpu.memory_space<vmem>>, %arg7: memref<2x128xf32, #tpu.memory_space<vmem>>, %arg8: memref<2x1xf32, #tpu.memory_space<vmem>>, %arg9: memref<1x2x56xf32, #tpu.memory_space<vmem>>) attributes {dimension_semantics = [#tpu.dimension_semantics<parallel>], iteration_bounds = array<i64: 2>, scalar_prefetch = 0 : i64, scratch_operands = 0 : i64, tpu.core_type = #tpu.core_type<tc>, window_params = [{transform_indices = @transform_0, window_bounds = array<i64: 56, 1>}, {transform_indices = @transform_1, window_bounds = array<i64: 1, 1, 56>}, {pipeline_mode = #tpu.pipeline_mode<synchronous>, transform_indices = @transform_2, window_bounds = array<i64: 1, 128>}, {pipeline_mode = #tpu.pipeline_mode<synchronous>, transform_indices = @transform_3, window_bounds = array<i64: 1, 128>}, {pipeline_mode = #tpu.pipeline_mode<synchronous>, transform_indices = @transform_4, window_bounds = array<i64: 4, 128, 128>}, {pipeline_mode = #tpu.pipeline_mode<synchronous>, transform_indices = @transform_5, window_bounds = array<i64: 4, 1, 128>}, {pipeline_mode = #tpu.pipeline_mode<synchronous>, transform_indices = @transform_6, window_bounds = array<i64: 2, 128>}, {pipeline_mode = #tpu.pipeline_mode<synchronous>, transform_indices = @transform_7, window_bounds = array<i64: 2, 1>}, {transform_indices = @transform_8, window_bounds = array<i64: 1, 2, 56>}]} {
    %c0 = arith.constant 0 : index
    %c0_0 = arith.constant 0 : index
    %0 = vector.load %arg1[%c0, %c0_0] : memref<56x1xf32, #tpu.memory_space<vmem>>, vector<56x1xf32>
    %c0_1 = arith.constant 0 : index
    %c0_2 = arith.constant 0 : index
    %1 = vector.load %arg3[%c0_1, %c0_2] : memref<1x128xf32, #tpu.memory_space<vmem>>, vector<1x128xf32>
    %2 = vector.broadcast %0 : vector<56x1xf32> to vector<56x128xf32>
    %3 = vector.broadcast %1 : vector<1x128xf32> to vector<56x128xf32>
    %4 = arith.mulf %2, %3 : vector<56x128xf32>
    %c0_3 = arith.constant 0 : index
    %c0_4 = arith.constant 0 : index
    %5 = vector.load %arg4[%c0_3, %c0_4] : memref<1x128xf32, #tpu.memory_space<vmem>>, vector<1x128xf32>
    %6 = vector.broadcast %5 : vector<1x128xf32> to vector<56x128xf32>
    %7 = arith.addf %4, %6 : vector<56x128xf32>
    %8 = math.tanh %7 : vector<56x128xf32>
    %c0_5 = arith.constant 0 : index
    %c0_6 = arith.constant 0 : index
    %c0_7 = arith.constant 0 : index
    %9 = vector.load %arg5[%c0_5, %c0_6, %c0_7] : memref<4x128x128xf32, #tpu.memory_space<vmem>>, vector<1x128x128xf32>
    %10 = vector.shape_cast %9 : vector<1x128x128xf32> to vector<128x128xf32>
    %cst = arith.constant dense<0.000000e+00> : vector<56x128xf32>
    %11 = tpu.matmul %8, %10, %cst {dimension_numbers = #tpu.dot_dimension_numbers<[1], [0], [0], [1], [0, 0, 1, 1], [], []>} : vector<56x128xf32>, vector<128x128xf32>, vector<56x128xf32> -> vector<56x128xf32>
    %c0_8 = arith.constant 0 : index
    %c0_9 = arith.constant 0 : index
    %c0_10 = arith.constant 0 : index
    %12 = vector.load %arg6[%c0_8, %c0_9, %c0_10] : memref<4x1x128xf32, #tpu.memory_space<vmem>>, vector<1x1x128xf32>
    %13 = vector.shape_cast %12 : vector<1x1x128xf32> to vector<1x128xf32>
    %14 = vector.broadcast %13 : vector<1x128xf32> to vector<56x128xf32>
    %15 = arith.addf %11, %14 : vector<56x128xf32>
    %16 = math.tanh %15 : vector<56x128xf32>
    %c1 = arith.constant 1 : index
    %c0_11 = arith.constant 0 : index
    %c0_12 = arith.constant 0 : index
    %17 = vector.load %arg5[%c1, %c0_11, %c0_12] : memref<4x128x128xf32, #tpu.memory_space<vmem>>, vector<1x128x128xf32>
    %18 = vector.shape_cast %17 : vector<1x128x128xf32> to vector<128x128xf32>
    %cst_13 = arith.constant dense<0.000000e+00> : vector<56x128xf32>
    %19 = tpu.matmul %16, %18, %cst_13 {dimension_numbers = #tpu.dot_dimension_numbers<[1], [0], [0], [1], [0, 0, 1, 1], [], []>} : vector<56x128xf32>, vector<128x128xf32>, vector<56x128xf32> -> vector<56x128xf32>
    %c1_14 = arith.constant 1 : index
    %c0_15 = arith.constant 0 : index
    %c0_16 = arith.constant 0 : index
    %20 = vector.load %arg6[%c1_14, %c0_15, %c0_16] : memref<4x1x128xf32, #tpu.memory_space<vmem>>, vector<1x1x128xf32>
    %21 = vector.shape_cast %20 : vector<1x1x128xf32> to vector<1x128xf32>
    %22 = vector.broadcast %21 : vector<1x128xf32> to vector<56x128xf32>
    %23 = arith.addf %19, %22 : vector<56x128xf32>
    %24 = math.tanh %23 : vector<56x128xf32>
    %c2 = arith.constant 2 : index
    %c0_17 = arith.constant 0 : index
    %c0_18 = arith.constant 0 : index
    %25 = vector.load %arg5[%c2, %c0_17, %c0_18] : memref<4x128x128xf32, #tpu.memory_space<vmem>>, vector<1x128x128xf32>
    %26 = vector.shape_cast %25 : vector<1x128x128xf32> to vector<128x128xf32>
    %cst_19 = arith.constant dense<0.000000e+00> : vector<56x128xf32>
    %27 = tpu.matmul %24, %26, %cst_19 {dimension_numbers = #tpu.dot_dimension_numbers<[1], [0], [0], [1], [0, 0, 1, 1], [], []>} : vector<56x128xf32>, vector<128x128xf32>, vector<56x128xf32> -> vector<56x128xf32>
    %c2_20 = arith.constant 2 : index
    %c0_21 = arith.constant 0 : index
    %c0_22 = arith.constant 0 : index
    %28 = vector.load %arg6[%c2_20, %c0_21, %c0_22] : memref<4x1x128xf32, #tpu.memory_space<vmem>>, vector<1x1x128xf32>
    %29 = vector.shape_cast %28 : vector<1x1x128xf32> to vector<1x128xf32>
    %30 = vector.broadcast %29 : vector<1x128xf32> to vector<56x128xf32>
    %31 = arith.addf %27, %30 : vector<56x128xf32>
    %32 = math.tanh %31 : vector<56x128xf32>
    %c3 = arith.constant 3 : index
    %c0_23 = arith.constant 0 : index
    %c0_24 = arith.constant 0 : index
    %33 = vector.load %arg5[%c3, %c0_23, %c0_24] : memref<4x128x128xf32, #tpu.memory_space<vmem>>, vector<1x128x128xf32>
    %34 = vector.shape_cast %33 : vector<1x128x128xf32> to vector<128x128xf32>
    %cst_25 = arith.constant dense<0.000000e+00> : vector<56x128xf32>
    %35 = tpu.matmul %32, %34, %cst_25 {dimension_numbers = #tpu.dot_dimension_numbers<[1], [0], [0], [1], [0, 0, 1, 1], [], []>} : vector<56x128xf32>, vector<128x128xf32>, vector<56x128xf32> -> vector<56x128xf32>
    %c3_26 = arith.constant 3 : index
    %c0_27 = arith.constant 0 : index
    %c0_28 = arith.constant 0 : index
    %36 = vector.load %arg6[%c3_26, %c0_27, %c0_28] : memref<4x1x128xf32, #tpu.memory_space<vmem>>, vector<1x1x128xf32>
    %37 = vector.shape_cast %36 : vector<1x1x128xf32> to vector<1x128xf32>
    %38 = vector.broadcast %37 : vector<1x128xf32> to vector<56x128xf32>
    %39 = arith.addf %35, %38 : vector<56x128xf32>
    %40 = math.tanh %39 : vector<56x128xf32>
    %c0_29 = arith.constant 0 : index
    %c0_30 = arith.constant 0 : index
    %41 = vector.load %arg7[%c0_29, %c0_30] : memref<2x128xf32, #tpu.memory_space<vmem>>, vector<2x128xf32>
    %cst_31 = arith.constant dense<0.000000e+00> : vector<2x56xf32>
    %42 = tpu.matmul %41, %40, %cst_31 {dimension_numbers = #tpu.dot_dimension_numbers<[1], [1], [0], [0], [0, 0, 1, 0], [], []>} : vector<2x128xf32>, vector<56x128xf32>, vector<2x56xf32> -> vector<2x56xf32>
    %c0_32 = arith.constant 0 : index
    %c0_33 = arith.constant 0 : index
    %43 = vector.load %arg8[%c0_32, %c0_33] : memref<2x1xf32, #tpu.memory_space<vmem>>, vector<2x1xf32>
    %44 = vector.broadcast %43 : vector<2x1xf32> to vector<2x56xf32>
    %45 = arith.addf %42, %44 : vector<2x56xf32>
    %c0_34 = arith.constant 0 : index
    %c0_35 = arith.constant 0 : index
    %c0_36 = arith.constant 0 : index
    %46 = vector.load %arg2[%c0_34, %c0_35, %c0_36] : memref<1x1x56xf32, #tpu.memory_space<vmem>>, vector<1x1x56xf32>
    %47 = vector.shape_cast %46 : vector<1x1x56xf32> to vector<1x56xf32>
    %cst_37 = arith.constant 1.000000e+00 : f32
    %48 = vector.broadcast %cst_37 : f32 to vector<1x56xf32>
    %49 = arith.subf %48, %47 : vector<1x56xf32>
    %50 = arith.mulf %47, %49 : vector<1x56xf32>
    %51 = tpu.iota {dimensions = array<i32: 0>} : vector<2x56xi32>
    %c0_i32 = arith.constant 0 : i32
    %52 = vector.broadcast %c0_i32 : i32 to vector<2x56xi32>
    %53 = arith.cmpi eq, %51, %52 : vector<2x56xi32>
    %54 = vector.broadcast %50 : vector<1x56xf32> to vector<2x56xf32>
    %55 = arith.mulf %45, %54 : vector<2x56xf32>
    %56 = arith.select %53, %55, %45 : vector<2x56xi1>, vector<2x56xf32>
    %c0_38 = arith.constant 0 : index
    %c0_39 = arith.constant 0 : index
    %c0_40 = arith.constant 0 : index
    %57 = vector.load %arg9[%c0_38, %c0_39, %c0_40] : memref<1x2x56xf32, #tpu.memory_space<vmem>>, vector<1x2x56xf32>
    %58 = vector.shape_cast %57 : vector<1x2x56xf32> to vector<2x56xf32>
    %59 = vector.shape_cast %56 : vector<2x56xf32> to vector<1x2x56xf32>
    tpu.vector_store %arg9[%c0_38, %c0_39, %c0_40], %59 {strides = array<i32>} : memref<1x2x56xf32, #tpu.memory_space<vmem>>, vector<1x2x56xf32>,
    return
  }
  func.func @transform_0(%arg0: i32) -> (i32, i32) {
    %c0_i32 = arith.constant 0 : i32
    %c0_i32_0 = arith.constant 0 : i32
    return %arg0, %c0_i32 : i32, i32
  }
  func.func @transform_1(%arg0: i32) -> (i32, i32, i32) {
    %c0_i32 = arith.constant 0 : i32
    %c0_i32_0 = arith.constant 0 : i32
    %c0_i32_1 = arith.constant 0 : i32
    return %arg0, %c0_i32, %c0_i32_0 : i32, i32, i32
  }
  func.func @transform_2(%arg0: i32) -> (i32, i32) {
    %c0_i32 = arith.constant 0 : i32
    %c0_i32_0 = arith.constant 0 : i32
    %c0_i32_1 = arith.constant 0 : i32
    return %c0_i32, %c0_i32_0 : i32, i32
  }
  func.func @transform_3(%arg0: i32) -> (i32, i32) {
    %c0_i32 = arith.constant 0 : i32
    %c0_i32_0 = arith.constant 0 : i32
    %c0_i32_1 = arith.constant 0 : i32
    return %c0_i32, %c0_i32_0 : i32, i32
  }
  func.func @transform_4(%arg0: i32) -> (i32, i32, i32) {
    %c0_i32 = arith.constant 0 : i32
    %c0_i32_0 = arith.constant 0 : i32
    %c0_i32_1 = arith.constant 0 : i32
    %c0_i32_2 = arith.constant 0 : i32
    return %c0_i32, %c0_i32_0, %c0_i32_1 : i32, i32, i32
  }
  func.func @transform_5(%arg0: i32) -> (i32, i32, i32) {
    %c0_i32 = arith.constant 0 : i32
    %c0_i32_0 = arith.constant 0 : i32
    %c0_i32_1 = arith.constant 0 : i32
    %c0_i32_2 = arith.constant 0 : i32
    return %c0_i32, %c0_i32_0, %c0_i32_1 : i32, i32, i32
  }
  func.func @transform_6(%arg0: i32) -> (i32, i32) {
    %c0_i32 = arith.constant 0 : i32
    %c0_i32_0 = arith.constant 0 : i32
    %c0_i32_1 = arith.constant 0 : i32
    return %c0_i32, %c0_i32_0 : i32, i32
  }
  func.func @transform_7(%arg0: i32) -> (i32, i32) {
    %c0_i32 = arith.constant 0 : i32
    %c0_i32_0 = arith.constant 0 : i32
    %c0_i32_1 = arith.constant 0 : i32
    return %c0_i32, %c0_i32_0 : i32, i32
  }
  func.func @transform_8(%arg0: i32) -> (i32, i32, i32) {
    %c0_i32 = arith.constant 0 : i32
    %c0_i32_0 = arith.constant 0 : i32
    %c0_i32_1 = arith.constant 0 : i32
    return %arg0, %c0_i32, %c0_i32_0 : i32, i32, i32
  }
}

</mosaic_0001>

<llo_original>
// kernel: squeeze.2
$region0: #{squeeze.2}
  %s0 = inlined_call_operand.vmem [shape: f32[2,56], index: 0, kind: input, shape index: {}]
  %s1 = inlined_call_operand.vmem [shape: f32[112], index: 1, kind: output, shape index: {}]
  $region1: #{squeeze.2} parent=0
    #allocation0 [shape = 'u8[4096]{0}', space=vmem, size = 0x1000, scoped, tag = 'scoped mem for output reshape']
    #allocation1 [shape = 'u8[4096]{0}', space=vmem, size = 0x1000, scoped, tag = 'scoped mem for input reshape']
    %s3 = sshll.u32 1, 2
    %s4 = ssub.s32 %s3, 1
    %v5 = vld [vmem:[%s0] sm:%s4]
    %6 = vst [vmem:[#allocation1] sm:%s4] %v5
    %v7 = vld [vmem:[#allocation1] sm:$0x1]
    %vm8 = vcmask 457728
    %9 = vst.msk [vmem:[#allocation0] sm:$0x1] %vm8, %v7
    %s10 = scalar_lea.vmem [#allocation1], 1
    %v11 = vld [vmem:[%s10] sm:$0x1]
    %12 = vrot.lane.b32.xlu0 %v11, 56
    %v13 = vpop.permute.xlu0 %12
    %vm14 = vcmask 916928
    %15 = vst.msk [vmem:[#allocation0] sm:$0x1] %vm14, %v13
    %s17 = sshll.u32 1, 1
    %s18 = ssub.s32 %s17, 1
    %v20 = vld [vmem:[#allocation0] sm:%s18]
    %s21 = sshll.u32 1, 1
    %s22 = ssub.s32 %s21, 1
    %23 = vst [vmem:[%s1] sm:%s22] %v20

// kernel: neural_network_forward.1
$region0: #{neural_network_forward.1}
  #allocation0 [shape = 'u32[]', space=smem, size = 0x4, offset = 0x4, fixed_abs, tag = 'smem constant byte address 0x4 - core index']
  #allocation1 [shape = 'u32[144,128]{1,0:T(1,128)}', space=vmem, size = 0x12000, scoped, tag = 'internal scratch']
  %s0 = inlined_call_operand.vmem [shape: f32[112,1], index: 0, kind: input, shape index: {}]
  %s1 = inlined_call_operand.vmem [shape: f32[2,1,56], index: 1, kind: input, shape index: {}]
  %s2 = inlined_call_operand.vmem [shape: f32[1,128], index: 2, kind: input, shape index: {}]
  %s3 = inlined_call_operand.vmem [shape: f32[1,128], index: 3, kind: input, shape index: {}]
  %s4 = inlined_call_operand.hbm [shape: f32[4,128,128], index: 4, kind: input, shape index: {}]
  %s5 = inlined_call_operand.vmem [shape: f32[4,1,128], index: 5, kind: input, shape index: {}]
  %s6 = inlined_call_operand.vmem [shape: f32[2,128], index: 6, kind: input, shape index: {}]
  %s7 = inlined_call_operand.vmem [shape: f32[2,1], index: 7, kind: input, shape index: {}]
  %s8 = inlined_call_operand.vmem [shape: f32[2,2,56], index: 8, kind: output, shape index: {}]
  %s9 = sld [smem:[#allocation0]]
  $region69: #{neural_network_forward.1} parent=0
    _
  %s11 = ssub.s32 1, %s9
  %s12 = scalar_select 0, %s11, %s9
  $region1: #{neural_network_forward.1} parent=0
    #allocation2 [shape = 'u8[262144]{0}', space=vmem, size = 0x40000, scoped, tag = 'input window, operand 4, single buffered']
    #allocation3 [shape = 's32[2]{0}', space=sflag, size = 0x8, scoped, tag = 'scoped memory for neural_network_forward.1']
    %13 = vsyncpa [#allocation3], 0
    loop: start=0, step=1, limit=4
    $region2: #{neural_network_forward.1} parent=1 // loop_pre_header
      _
    $region3: #{neural_network_forward.1} parent=1 // loop_header
      %s15 = sphi 0, %s19
      %p16 = scmp.ge.s32.totalorder %s15, 4
      %s25 = sphi 0, %s27
      %s28 = sphi 0, %s25
      %s29 = sphi 0, %s28
      %s45 = sphi 0, %s29
      %s51 = sphi 0, %s53
      %s54 = sphi 0, %s51
      %s55 = sphi 0, %s54
      %s71 = sphi 0, %s55
      %s75 = sphi 0, %s75
      %s77 = sphi 0, %s75
      %s78 = sphi 0, %s77
      %s92 = sphi 0, %s78
      %s96 = sphi 0, %s96
      %s98 = sphi 0, %s96
      %s99 = sphi 0, %s98
      %s113 = sphi 0, %s99
      %s117 = sphi 0, %s117
      %s119 = sphi 0, %s117
      %s120 = sphi 0, %s119
      %s134 = sphi 0, %s120
      %s138 = sphi 0, %s138
      %s140 = sphi 0, %s138
      %s141 = sphi 0, %s140
      %s155 = sphi 0, %s141
      %s159 = sphi 0, %s159
      %s161 = sphi 0, %s159
      %s162 = sphi 0, %s161
      %s176 = sphi 0, %s162
      %s180 = sphi 0, %s180
      %s182 = sphi 0, %s180
      %s183 = sphi 0, %s182
      %s197 = sphi 0, %s183
      %s203 = sphi 0, %s205
      %s206 = sphi 0, %s203
      %s207 = sphi 0, %s206
      %s223 = sphi 0, %s207
    $region4: #{neural_network_forward.1} parent=1 // loop_header_branch
      %18 = sbr.rel (%p16) target = $region8
    $region5: #{neural_network_forward.1} parent=1 // loop_body
      %s20 = ssub.s32 %s15, 1
      %s21 = ssub.s32 %s15, 2
      %s22 = sadd.s32 %s15, 1
      %s23 = ssub.s32 %s15, %s22
      %p24 = scmp.eq.s32.totalorder %s23, 0
      %s26 = sadd.s32 %s25, 1
      %s27 = scalar_select %p24, %s25, %s26
      %p30 = pneg %p24
      %p31 = scmp.eq.s32.totalorder %s15, 1
      %p32 = por %p30, %p31
      %p33 = scmp.ne.s32.totalorder %s25, %s28
      %p34 = scmp.eq.s32.totalorder %s15, 0
      %p35 = por %p33, %p34
      %p36 = scmp.ne.s32.totalorder %s25, %s28
      %p37 = scmp.eq.s32.totalorder %s20, 1
      %p38 = por %p36, %p37
      %p39 = scmp.ne.s32.totalorder %s28, %s29
      %p40 = scmp.eq.s32.totalorder %s20, 0
      %p41 = por %p39, %p40
      %p42 = scmp.ne.s32.totalorder %s28, %s29
      %p43 = scmp.eq.s32.totalorder %s21, 1
      %p44 = por %p42, %p43
      %p46 = scmp.ne.s32.totalorder %s29, %s45
      %p47 = scmp.eq.s32.totalorder %s21, 0
      %p48 = por %p46, %p47
      %s49 = ssub.s32 %s15, %s22
      %p50 = scmp.eq.s32.totalorder %s49, 0
      %s52 = sadd.s32 %s51, 1
      %s53 = scalar_select %p50, %s51, %s52
      %p56 = pneg %p50
      %p57 = scmp.eq.s32.totalorder %s15, 1
      %p58 = por %p56, %p57
      %p59 = scmp.ne.s32.totalorder %s51, %s54
      %p60 = scmp.eq.s32.totalorder %s15, 0
      %p61 = por %p59, %p60
      %p62 = scmp.ne.s32.totalorder %s51, %s54
      %p63 = scmp.eq.s32.totalorder %s20, 1
      %p64 = por %p62, %p63
      %p65 = scmp.ne.s32.totalorder %s54, %s55
      %p66 = scmp.eq.s32.totalorder %s20, 0
      %p67 = por %p65, %p66
      %p68 = scmp.ne.s32.totalorder %s54, %s55
      %p69 = scmp.eq.s32.totalorder %s21, 1
      %p70 = por %p68, %p69
      %p72 = scmp.ne.s32.totalorder %s55, %s71
      %p73 = scmp.eq.s32.totalorder %s21, 0
      %p74 = por %p72, %p73
      %s76 = sadd.s32 %s75, 1
      %p79 = scmp.eq.s32.totalorder %s15, 1
      %p80 = scmp.ne.s32.totalorder %s75, %s77
      %p81 = scmp.eq.s32.totalorder %s15, 0
      %p82 = por %p80, %p81
      %p83 = scmp.ne.s32.totalorder %s75, %s77
      %p84 = scmp.eq.s32.totalorder %s20, 1
      %p85 = por %p83, %p84
      %p86 = scmp.ne.s32.totalorder %s77, %s78
      %p87 = scmp.eq.s32.totalorder %s20, 0
      %p88 = por %p86, %p87
      %p89 = scmp.ne.s32.totalorder %s77, %s78
      %p90 = scmp.eq.s32.totalorder %s21, 1
      %p91 = por %p89, %p90
      %p93 = scmp.ne.s32.totalorder %s78, %s92
      %p94 = scmp.eq.s32.totalorder %s21, 0
      %p95 = por %p93, %p94
      %s97 = sadd.s32 %s96, 1
      %p100 = scmp.eq.s32.totalorder %s15, 1
      %p101 = scmp.ne.s32.totalorder %s96, %s98
      %p102 = scmp.eq.s32.totalorder %s15, 0
      %p103 = por %p101, %p102
      %p104 = scmp.ne.s32.totalorder %s96, %s98
      %p105 = scmp.eq.s32.totalorder %s20, 1
      %p106 = por %p104, %p105
      %p107 = scmp.ne.s32.totalorder %s98, %s99
      %p108 = scmp.eq.s32.totalorder %s20, 0
      %p109 = por %p107, %p108
      %p110 = scmp.ne.s32.totalorder %s98, %s99
      %p111 = scmp.eq.s32.totalorder %s21, 1
      %p112 = por %p110, %p111
      %p114 = scmp.ne.s32.totalorder %s99, %s113
      %p115 = scmp.eq.s32.totalorder %s21, 0
      %p116 = por %p114, %p115
      %s118 = sadd.s32 %s117, 1
      %p121 = scmp.eq.s32.totalorder %s15, 1
      %p122 = scmp.ne.s32.totalorder %s117, %s119
      %p123 = scmp.eq.s32.totalorder %s15, 0
      %p124 = por %p122, %p123
      %p125 = scmp.ne.s32.totalorder %s117, %s119
      %p126 = scmp.eq.s32.totalorder %s20, 1
      %p127 = por %p125, %p126
      %p128 = scmp.ne.s32.totalorder %s119, %s120
      %p129 = scmp.eq.s32.totalorder %s20, 0
      %p130 = por %p128, %p129
      %p131 = scmp.ne.s32.totalorder %s119, %s120
      %p132 = scmp.eq.s32.totalorder %s21, 1
      %p133 = por %p131, %p132
      %p135 = scmp.ne.s32.totalorder %s120, %s134
      %p136 = scmp.eq.s32.totalorder %s21, 0
      %p137 = por %p135, %p136
      %s139 = sadd.s32 %s138, 1
      %p142 = scmp.eq.s32.totalorder %s15, 1
      %p143 = scmp.ne.s32.totalorder %s138, %s140
      %p144 = scmp.eq.s32.totalorder %s15, 0
      %p145 = por %p143, %p144
      %p146 = scmp.ne.s32.totalorder %s138, %s140
      %p147 = scmp.eq.s32.totalorder %s20, 1
      %p148 = por %p146, %p147
      %p149 = scmp.ne.s32.totalorder %s140, %s141
      %p150 = scmp.eq.s32.totalorder %s20, 0
      %p151 = por %p149, %p150
      %p152 = scmp.ne.s32.totalorder %s140, %s141
      %p153 = scmp.eq.s32.totalorder %s21, 1
      %p154 = por %p152, %p153
      %p156 = scmp.ne.s32.totalorder %s141, %s155
      %p157 = scmp.eq.s32.totalorder %s21, 0
      %p158 = por %p156, %p157
      %s160 = sadd.s32 %s159, 1
      %p163 = scmp.eq.s32.totalorder %s15, 1
      %p164 = scmp.ne.s32.totalorder %s159, %s161
      %p165 = scmp.eq.s32.totalorder %s15, 0
      %p166 = por %p164, %p165
      %p167 = scmp.ne.s32.totalorder %s159, %s161
      %p168 = scmp.eq.s32.totalorder %s20, 1
      %p169 = por %p167, %p168
      %p170 = scmp.ne.s32.totalorder %s161, %s162
      %p171 = scmp.eq.s32.totalorder %s20, 0
      %p172 = por %p170, %p171
      %p173 = scmp.ne.s32.totalorder %s161, %s162
      %p174 = scmp.eq.s32.totalorder %s21, 1
      %p175 = por %p173, %p174
      %p177 = scmp.ne.s32.totalorder %s162, %s176
      %p178 = scmp.eq.s32.totalorder %s21, 0
      %p179 = por %p177, %p178
      %s181 = sadd.s32 %s180, 1
      %p184 = scmp.eq.s32.totalorder %s15, 1
      %p185 = scmp.ne.s32.totalorder %s180, %s182
      %p186 = scmp.eq.s32.totalorder %s15, 0
      %p187 = por %p185, %p186
      %p188 = scmp.ne.s32.totalorder %s180, %s182
      %p189 = scmp.eq.s32.totalorder %s20, 1
      %p190 = por %p188, %p189
      %p191 = scmp.ne.s32.totalorder %s182, %s183
      %p192 = scmp.eq.s32.totalorder %s20, 0
      %p193 = por %p191, %p192
      %p194 = scmp.ne.s32.totalorder %s182, %s183
      %p195 = scmp.eq.s32.totalorder %s21, 1
      %p196 = por %p194, %p195
      %p198 = scmp.ne.s32.totalorder %s183, %s197
      %p199 = scmp.eq.s32.totalorder %s21, 0
      %p200 = por %p198, %p199
      %s201 = ssub.s32 %s15, %s22
      %p202 = scmp.eq.s32.totalorder %s201, 0
      %s204 = sadd.s32 %s203, 1
      %s205 = scalar_select %p202, %s203, %s204
      %p208 = pneg %p202
      %p209 = scmp.eq.s32.totalorder %s15, 1
      %p210 = por %p208, %p209
      %p211 = scmp.ne.s32.totalorder %s203, %s206
      %p212 = scmp.eq.s32.totalorder %s15, 0
      %p213 = por %p211, %p212
      %p214 = scmp.ne.s32.totalorder %s203, %s206
      %p215 = scmp.eq.s32.totalorder %s20, 1
      %p216 = por %p214, %p215
      %p217 = scmp.ne.s32.totalorder %s206, %s207
      %p218 = scmp.eq.s32.totalorder %s20, 0
      %p219 = por %p217, %p218
      %p220 = scmp.ne.s32.totalorder %s206, %s207
      %p221 = scmp.eq.s32.totalorder %s21, 1
      %p222 = por %p220, %p221
      %p224 = scmp.ne.s32.totalorder %s207, %s223
      %p225 = scmp.eq.s32.totalorder %s21, 0
      %p226 = por %p224, %p225
      %p227 = scmp.le.s32.totalorder 1, %s15
      %p228 = scmp.lt.s32.totalorder %s15, 3
      %p229 = pnand %p227, %p228
      %p230 = pneg %p229
      // Predicated region
      $region9: #{neural_network_forward.1} parent=5 // pred_check
        _
      $region10: #{neural_network_forward.1} parent=5 // pred_check_branch
        %232 = sbr.rel (%p229) target = $region12
      $region11: #{neural_network_forward.1} parent=5 // pred_region
        %s233 = ssub.s32 %s15, 1
        // Predicated region
        $region13: #{neural_network_forward.1} parent=11 // pred_check
          %p234 = pneg %p88
        $region14: #{neural_network_forward.1} parent=11 // pred_check_branch
          %236 = sbr.rel (%p234) target = $region16
        $region15: #{neural_network_forward.1} parent=11 // pred_region
          _
        $region16: #{neural_network_forward.1} parent=11 // pred_fallthru
          _
        // Predicated region
        $region17: #{neural_network_forward.1} parent=11 // pred_check
          %p237 = pneg %p109
        $region18: #{neural_network_forward.1} parent=11 // pred_check_branch
          %239 = sbr.rel (%p237) target = $region20
        $region19: #{neural_network_forward.1} parent=11 // pred_region
          _
        $region20: #{neural_network_forward.1} parent=11 // pred_fallthru
          _
        // Predicated region
        $region21: #{neural_network_forward.1} parent=11 // pred_check
          %p240 = pneg %p130
        $region22: #{neural_network_forward.1} parent=11 // pred_check_branch
          %242 = sbr.rel (%p240) target = $region24
        $region23: #{neural_network_forward.1} parent=11 // pred_region
          %s244 = ssub.s32 8192, 8192
          %245 = vsyncadd [#allocation3], %s244
          %s246 = sshll.u32 [#allocation2], 4
          %s247 = int_to_ptr.vmem [resolvable:$true] %s246
          %252 = dma.hbm_to_vmem [thread:$0]  %s4, 8192, %s247, [#allocation3], 128, 128, 8
        $region24: #{neural_network_forward.1} parent=11 // pred_fallthru
          _
        // Predicated region
        $region25: #{neural_network_forward.1} parent=11 // pred_check
          %p253 = pneg %p151
        $region26: #{neural_network_forward.1} parent=11 // pred_check_branch
          %255 = sbr.rel (%p253) target = $region28
        $region27: #{neural_network_forward.1} parent=11 // pred_region
          _
        $region28: #{neural_network_forward.1} parent=11 // pred_fallthru
          _
        // Predicated region
        $region29: #{neural_network_forward.1} parent=11 // pred_check
          %p256 = pneg %p172
        $region30: #{neural_network_forward.1} parent=11 // pred_check_branch
          %258 = sbr.rel (%p256) target = $region32
        $region31: #{neural_network_forward.1} parent=11 // pred_region
          _
        $region32: #{neural_network_forward.1} parent=11 // pred_fallthru
          _
        // Predicated region
        $region33: #{neural_network_forward.1} parent=11 // pred_check
          %p259 = pneg %p193
        $region34: #{neural_network_forward.1} parent=11 // pred_check_branch
          %261 = sbr.rel (%p259) target = $region36
        $region35: #{neural_network_forward.1} parent=11 // pred_region
          _
        $region36: #{neural_network_forward.1} parent=11 // pred_fallthru
          _
      $region12: #{neural_network_forward.1} parent=5 // pred_fallthru
        _
      %p262 = scmp.lt.s32.totalorder %s15, 2
      // Predicated region
      $region37: #{neural_network_forward.1} parent=5 // pred_check
        %p263 = pneg %p262
      $region38: #{neural_network_forward.1} parent=5 // pred_check_branch
        %265 = sbr.rel (%p263) target = $region40
      $region39: #{neural_network_forward.1} parent=5 // pred_region
        // Predicated region
        $region41: #{neural_network_forward.1} parent=39 // pred_check
          %p266 = pneg %p35
        $region42: #{neural_network_forward.1} parent=39 // pred_check_branch
          %268 = sbr.rel (%p266) target = $region44
        $region43: #{neural_network_forward.1} parent=39 // pred_region
          %s269 = smul.u32 7, %s15
          %p270 = scmp.lt.s32.totalorder %s269, 13
          %s271 = scalar_select %p270, %s269, 13
          %s272 = smul.addr %s271, 8
          %s273 = scalar_lea.vmem %s0, %s272
          %s274 = smul.u32 7, %s15
        $region44: #{neural_network_forward.1} parent=39 // pred_fallthru
          _
        // Predicated region
        $region45: #{neural_network_forward.1} parent=39 // pred_check
          %p275 = pneg %p61
        $region46: #{neural_network_forward.1} parent=39 // pred_check_branch
          %277 = sbr.rel (%p275) target = $region48
        $region47: #{neural_network_forward.1} parent=39 // pred_region
          %p278 = scmp.lt.s32.totalorder %s15, 1
          %s279 = scalar_select %p278, %s15, 1
          %s280 = scalar_lea.vmem %s1, %s279
        $region48: #{neural_network_forward.1} parent=39 // pred_fallthru
          _
      $region40: #{neural_network_forward.1} parent=5 // pred_fallthru
        _
      %p281 = scmp.le.s32.totalorder 1, %s15
      %p282 = scmp.lt.s32.totalorder %s15, 3
      %p283 = pnand %p281, %p282
      %p284 = pneg %p283
      // Predicated region
      $region49: #{neural_network_forward.1} parent=5 // pred_check
        _
      $region50: #{neural_network_forward.1} parent=5 // pred_check_branch
        %286 = sbr.rel (%p283) target = $region52
      $region51: #{neural_network_forward.1} parent=5 // pred_region
        %s287 = ssub.s32 %s15, 1
        // Predicated region
        $region53: #{neural_network_forward.1} parent=51 // pred_check
          %p288 = pneg %p130
        $region54: #{neural_network_forward.1} parent=51 // pred_check_branch
          %290 = sbr.rel (%p288) target = $region56
        $region55: #{neural_network_forward.1} parent=51 // pred_region
          %291 = dma.done [#allocation3], 8192
        $region56: #{neural_network_forward.1} parent=51 // pred_fallthru
          _
        %s292 = smul.u32 7, %s20
        %p293 = scmp.lt.s32.totalorder %s292, 13
        %s294 = scalar_select %p293, %s292, 13
        %s295 = smul.addr %s294, 8
        %s296 = scalar_lea.vmem %s0, %s295
        %p297 = pneg %p41
        %p298 = pneg %p38
        %p299 = scmp.lt.s32.totalorder %s20, 1
        %s300 = scalar_select %p299, %s20, 1
        %s301 = scalar_lea.vmem %s1, %s300
        %p302 = pneg %p67
        %p303 = pneg %p64
        %p304 = pneg %p88
        %p305 = pneg %p85
        %p306 = pneg %p109
        %p307 = pneg %p106
        %p308 = pneg %p130
        %p309 = pneg %p127
        %p310 = pneg %p151
        %p311 = pneg %p148
        %p312 = pneg %p172
        %p313 = pneg %p169
        %p314 = pneg %p193
        %p315 = pneg %p190
        %p316 = pneg %p219
        %p317 = pneg %p216
        %p318 = scmp.lt.s32.totalorder %s20, 1
        %s319 = scalar_select %p318, %s20, 1
        %s320 = smul.addr %s319, 2
        %s321 = scalar_lea.vmem %s8, %s320
        %s322 = smul.u32 7, %s20
        %p323 = scmp.lt.s32.totalorder %s322, 13
        %s324 = scalar_select %p323, %s322, 13
        %s325 = smul.addr %s324, 8
        %s326 = scalar_lea.vmem %s0, %s325
        %s327 = smul.u32 7, %s20
        %p328 = scmp.lt.s32.totalorder %s20, 1
        %s329 = scalar_select %p328, %s20, 1
        %s330 = scalar_lea.vmem %s1, %s329
        %p331 = scmp.lt.s32.totalorder %s20, 1
        %s332 = scalar_select %p331, %s20, 1
        %s333 = smul.addr %s332, 2
        %s334 = scalar_lea.vmem %s8, %s333
        %v335 = vld [vmem:[%s326] sm:$0xff]
        %v336 = vld [vmem:[%s326 + $0x8] sm:$0xff]
        %v337 = vld [vmem:[%s326 + $0x10] sm:$0xff]
        %v338 = vld [vmem:[%s326 + $0x18] sm:$0xff]
        %v339 = vld [vmem:[%s326 + $0x20] sm:$0xff]
        %v340 = vld [vmem:[%s326 + $0x28] sm:$0xff]
        %v341 = vld [vmem:[%s326 + $0x30] sm:$0xff]
        %v342 = vld [vmem:[%s2] sm:$0x1]
        %344 = vset.pattern.permute.xlu0 0
        %345 = vperm.xlu0 %344, %v335
        %v346 = vpop.permute.xlu0 %345
        %349 = vset.pattern.permute.xlu0 0
        %350 = vperm.xlu0 %349, %v336
        %v351 = vpop.permute.xlu0 %350
        %354 = vset.pattern.permute.xlu0 0
        %355 = vperm.xlu0 %354, %v337
        %v356 = vpop.permute.xlu0 %355
        %359 = vset.pattern.permute.xlu0 0
        %360 = vperm.xlu0 %359, %v338
        %v361 = vpop.permute.xlu0 %360
        %364 = vset.pattern.permute.xlu0 0
        %365 = vperm.xlu0 %364, %v339
        %v366 = vpop.permute.xlu0 %365
        %369 = vset.pattern.permute.xlu0 0
        %370 = vperm.xlu0 %369, %v340
        %v371 = vpop.permute.xlu0 %370
        %374 = vset.pattern.permute.xlu0 0
        %375 = vperm.xlu0 %374, %v341
        %v376 = vpop.permute.xlu0 %375
        %v379 = vlaneseq
        %v380 = vshrl.u32 %v379, 7
        %v381 = vsub.s32 0, %v380
        %v382 = vrot.slane %v342, %v381
        %v384 = vmul.f32 %v346, %v382
        %v385 = vmul.f32 %v351, %v382
        %v386 = vmul.f32 %v356, %v382
        %v387 = vmul.f32 %v361, %v382
        %v388 = vmul.f32 %v366, %v382
        %v389 = vmul.f32 %v371, %v382
        %v390 = vmul.f32 %v376, %v382
        %v391 = vld [vmem:[%s3] sm:$0x1]
        %v393 = vlaneseq
        %v394 = vshrl.u32 %v393, 7
        %v395 = vsub.s32 0, %v394
        %v396 = vrot.slane %v391, %v395
        %v398 = vadd.f32 %v384, %v396
        %v399 = vadd.f32 %v385, %v396
        %v400 = vadd.f32 %v386, %v396
        %v401 = vadd.f32 %v387, %v396
        %v402 = vadd.f32 %v388, %v396
        %v403 = vadd.f32 %v389, %v396
        %v404 = vadd.f32 %v390, %v396
        %v405 = vtanh.pop %v398
        %v406 = vtanh.pop %v399
        %v407 = vtanh.pop %v400
        %v408 = vtanh.pop %v401
        %v409 = vtanh.pop %v402
        %v410 = vtanh.pop %v403
        %v411 = vtanh.pop %v404
        %v412 = vld [vmem:[#allocation2] sm:$0xff]
        %v413 = vld [vmem:[#allocation2 + $0x8] sm:$0xff]
        %v414 = vld [vmem:[#allocation2 + $0x10] sm:$0xff]
        %v415 = vld [vmem:[#allocation2 + $0x18] sm:$0xff]
        %v416 = vld [vmem:[#allocation2 + $0x20] sm:$0xff]
        %v417 = vld [vmem:[#allocation2 + $0x28] sm:$0xff]
        %v418 = vld [vmem:[#allocation2 + $0x30] sm:$0xff]
        %v419 = vld [vmem:[#allocation2 + $0x38] sm:$0xff]
        %v420 = vld [vmem:[#allocation2 + $0x40] sm:$0xff]
        %v421 = vld [vmem:[#allocation2 + $0x48] sm:$0xff]
        %v422 = vld [vmem:[#allocation2 + $0x50] sm:$0xff]
        %v423 = vld [vmem:[#allocation2 + $0x58] sm:$0xff]
        %v424 = vld [vmem:[#allocation2 + $0x60] sm:$0xff]
        %v425 = vld [vmem:[#allocation2 + $0x68] sm:$0xff]
        %v426 = vld [vmem:[#allocation2 + $0x70] sm:$0xff]
        %v427 = vld [vmem:[#allocation2 + $0x78] sm:$0xff]
        %v428 = vld [vmem:[%s5] sm:$0x1]
        %v430 = vlaneseq
        %v431 = vshrl.u32 %v430, 7
        %v432 = vsub.s32 0, %v431
        %v433 = vrot.slane %v428, %v432
        %435 = vmatprep.subr.mxu0 0.0
        %436 = vmatpush1.msra.mxu0 %v427
        %437 = vmatprep.subr.mxu0 0.0
        %438 = vmatpush1.msra.mxu0 %v426
        %439 = vmatprep.subr.mxu0 0.0
        %440 = vmatpush1.msra.mxu0 %v425
        %441 = vmatprep.subr.mxu0 0.0
        %442 = vmatpush1.msra.mxu0 %v424
        %443 = vmatprep.subr.mxu0 0.0
        %444 = vmatpush1.msra.mxu0 %v423
        %445 = vmatprep.subr.mxu0 0.0
        %446 = vmatpush1.msra.mxu0 %v422
        %447 = vmatprep.subr.mxu0 0.0
        %448 = vmatpush1.msra.mxu0 %v421
        %449 = vmatprep.subr.mxu0 0.0
        %450 = vmatpush1.msra.mxu0 %v420
        %451 = vmatprep.subr.mxu0 0.0
        %452 = vmatpush1.msra.mxu0 %v419
        %453 = vmatprep.subr.mxu0 0.0
        %454 = vmatpush1.msra.mxu0 %v418
        %455 = vmatprep.subr.mxu0 0.0
        %456 = vmatpush1.msra.mxu0 %v417
        %457 = vmatprep.subr.mxu0 0.0
        %458 = vmatpush1.msra.mxu0 %v416
        %459 = vmatprep.subr.mxu0 0.0
        %460 = vmatpush1.msra.mxu0 %v415
        %461 = vmatprep.subr.mxu0 0.0
        %462 = vmatpush1.msra.mxu0 %v414
        %463 = vmatprep.subr.mxu0 0.0
        %464 = vmatpush1.msra.mxu0 %v413
        %465 = vmatprep.subr.mxu0 0.0
        %466 = vmatpush1.msra.mxu0 %v412
        %467 = vmatprep.subr.mxu0 0.0
        %468 = vmatpush2.msra.mxu0 0.0
        %469 = vmatprep.subr.mxu0 0.0
        %470 = vmatpush2.msra.mxu0 0.0
        %471 = vmatprep.subr.mxu0 0.0
        %472 = vmatpush2.msra.mxu0 0.0
        %473 = vmatprep.subr.mxu0 0.0
        %474 = vmatpush2.msra.mxu0 0.0
        %475 = vmatprep.subr.mxu0 0.0
        %476 = vmatpush2.msra.mxu0 0.0
        %477 = vmatprep.subr.mxu0 0.0
        %478 = vmatpush2.msra.mxu0 0.0
        %479 = vmatprep.subr.mxu0 0.0
        %480 = vmatpush2.msra.mxu0 0.0
        %481 = vmatprep.subr.mxu0 0.0
        %482 = vmatpush2.msra.mxu0 0.0
        %483 = vmatprep.subr.mxu0 0.0
        %484 = vmatpush2.msra.mxu0 0.0
        %485 = vmatprep.subr.mxu0 0.0
        %486 = vmatpush2.msra.mxu0 0.0
        %487 = vmatprep.subr.mxu0 0.0
        %488 = vmatpush2.msra.mxu0 0.0
        %489 = vmatprep.subr.mxu0 0.0
        %490 = vmatpush2.msra.mxu0 0.0
        %491 = vmatprep.subr.mxu0 0.0
        %492 = vmatpush2.msra.mxu0 0.0
        %493 = vmatprep.subr.mxu0 0.0
        %494 = vmatpush2.msra.mxu0 0.0
        %495 = vmatprep.subr.mxu0 0.0
        %496 = vmatpush2.msra.mxu0 0.0
        %497 = vmatprep.subr.mxu0 0.0
        %498 = vmatpush2.msra.mxu0 0.0
        %499 = vmatprep.mubr.f32.mxu0 0.0
        %500 = vmatmul.mubr.f32.gmra.mxu0 %v405
        %v501 = vpop.f32.mrf.mxu0
        %v502 = vadd.f32 %v433, %v501
        %v503 = vpop.f32.mrf.mxu0
        %504 = vmatprep.mubr.f32.mxu0 0.0
        %505 = vmatmul.mubr.f32.gmra.mxu0 %v406
        %v506 = vpop.f32.mrf.mxu0
        %v507 = vadd.f32 %v433, %v506
        %v508 = vpop.f32.mrf.mxu0
        %509 = vmatprep.mubr.f32.mxu0 0.0
        %510 = vmatmul.mubr.f32.gmra.mxu0 %v407
        %v511 = vpop.f32.mrf.mxu0
        %v512 = vadd.f32 %v433, %v511
        %v513 = vpop.f32.mrf.mxu0
        %514 = vmatprep.mubr.f32.mxu0 0.0
        %515 = vmatmul.mubr.f32.gmra.mxu0 %v408
        %v516 = vpop.f32.mrf.mxu0
        %v517 = vadd.f32 %v433, %v516
        %v518 = vpop.f32.mrf.mxu0
        %519 = vmatprep.mubr.f32.mxu0 0.0
        %520 = vmatmul.mubr.f32.gmra.mxu0 %v409
        %v521 = vpop.f32.mrf.mxu0
        %v522 = vadd.f32 %v433, %v521
        %v523 = vpop.f32.mrf.mxu0
        %524 = vmatprep.mubr.f32.mxu0 0.0
        %525 = vmatmul.mubr.f32.gmra.mxu0 %v410
        %v526 = vpop.f32.mrf.mxu0
        %v527 = vadd.f32 %v433, %v526
        %v528 = vpop.f32.mrf.mxu0
        %529 = vmatprep.mubr.f32.mxu0 0.0
        %530 = vmatmul.mubr.f32.gmra.mxu0 %v411
        %v531 = vpop.f32.mrf.mxu0
        %v532 = vadd.f32 %v433, %v531
        %v533 = vpop.f32.mrf.mxu0
        %534 = vdwg.mxu0
        %v535 = vtanh.pop %v502
        %v536 = vtanh.pop %v507
        %v537 = vtanh.pop %v512
        %v538 = vtanh.pop %v517
        %v539 = vtanh.pop %v522
        %v540 = vtanh.pop %v527
        %v541 = vtanh.pop %v532
        %s542 = scalar_lea.vmem [#allocation2], 128
        %v543 = vld [vmem:[%s542] sm:$0xff]
        %v544 = vld [vmem:[%s542 + $0x8] sm:$0xff]
        %v545 = vld [vmem:[%s542 + $0x10] sm:$0xff]
        %v546 = vld [vmem:[%s542 + $0x18] sm:$0xff]
        %v547 = vld [vmem:[%s542 + $0x20] sm:$0xff]
        %v548 = vld [vmem:[%s542 + $0x28] sm:$0xff]
        %v549 = vld [vmem:[%s542 + $0x30] sm:$0xff]
        %v550 = vld [vmem:[%s542 + $0x38] sm:$0xff]
        %v551 = vld [vmem:[%s542 + $0x40] sm:$0xff]
        %v552 = vld [vmem:[%s542 + $0x48] sm:$0xff]
        %v553 = vld [vmem:[%s542 + $0x50] sm:$0xff]
        %v554 = vld [vmem:[%s542 + $0x58] sm:$0xff]
        %v555 = vld [vmem:[%s542 + $0x60] sm:$0xff]
        %v556 = vld [vmem:[%s542 + $0x68] sm:$0xff]
        %v557 = vld [vmem:[%s542 + $0x70] sm:$0xff]
        %v558 = vld [vmem:[%s542 + $0x78] sm:$0xff]
        %s559 = scalar_lea.vmem %s5, 1
        %v560 = vld [vmem:[%s559] sm:$0x1]
        %v562 = vlaneseq
        %v563 = vshrl.u32 %v562, 7
        %v564 = vsub.s32 0, %v563
        %v565 = vrot.slane %v560, %v564
        %567 = vmatprep.subr.mxu0 0.0
        %568 = vmatpush1.msra.mxu0 %v558
        %569 = vmatprep.subr.mxu0 0.0
        %570 = vmatpush1.msra.mxu0 %v557
        %571 = vmatprep.subr.mxu0 0.0
        %572 = vmatpush1.msra.mxu0 %v556
        %573 = vmatprep.subr.mxu0 0.0
        %574 = vmatpush1.msra.mxu0 %v555
        %575 = vmatprep.subr.mxu0 0.0
        %576 = vmatpush1.msra.mxu0 %v554
        %577 = vmatprep.subr.mxu0 0.0
        %578 = vmatpush1.msra.mxu0 %v553
        %579 = vmatprep.subr.mxu0 0.0
        %580 = vmatpush1.msra.mxu0 %v552
        %581 = vmatprep.subr.mxu0 0.0
        %582 = vmatpush1.msra.mxu0 %v551
        %583 = vmatprep.subr.mxu0 0.0
        %584 = vmatpush1.msra.mxu0 %v550
        %585 = vmatprep.subr.mxu0 0.0
        %586 = vmatpush1.msra.mxu0 %v549
        %587 = vmatprep.subr.mxu0 0.0
        %588 = vmatpush1.msra.mxu0 %v548
        %589 = vmatprep.subr.mxu0 0.0
        %590 = vmatpush1.msra.mxu0 %v547
        %591 = vmatprep.subr.mxu0 0.0
        %592 = vmatpush1.msra.mxu0 %v546
        %593 = vmatprep.subr.mxu0 0.0
        %594 = vmatpush1.msra.mxu0 %v545
        %595 = vmatprep.subr.mxu0 0.0
        %596 = vmatpush1.msra.mxu0 %v544
        %597 = vmatprep.subr.mxu0 0.0
        %598 = vmatpush1.msra.mxu0 %v543
        %599 = vmatprep.subr.mxu0 0.0
        %600 = vmatpush2.msra.mxu0 0.0
        %601 = vmatprep.subr.mxu0 0.0
        %602 = vmatpush2.msra.mxu0 0.0
        %603 = vmatprep.subr.mxu0 0.0
        %604 = vmatpush2.msra.mxu0 0.0
        %605 = vmatprep.subr.mxu0 0.0
        %606 = vmatpush2.msra.mxu0 0.0
        %607 = vmatprep.subr.mxu0 0.0
        %608 = vmatpush2.msra.mxu0 0.0
        %609 = vmatprep.subr.mxu0 0.0
        %610 = vmatpush2.msra.mxu0 0.0
        %611 = vmatprep.subr.mxu0 0.0
        %612 = vmatpush2.msra.mxu0 0.0
        %613 = vmatprep.subr.mxu0 0.0
        %614 = vmatpush2.msra.mxu0 0.0
        %615 = vmatprep.subr.mxu0 0.0
        %616 = vmatpush2.msra.mxu0 0.0
        %617 = vmatprep.subr.mxu0 0.0
        %618 = vmatpush2.msra.mxu0 0.0
        %619 = vmatprep.subr.mxu0 0.0
        %620 = vmatpush2.msra.mxu0 0.0
        %621 = vmatprep.subr.mxu0 0.0
        %622 = vmatpush2.msra.mxu0 0.0
        %623 = vmatprep.subr.mxu0 0.0
        %624 = vmatpush2.msra.mxu0 0.0
        %625 = vmatprep.subr.mxu0 0.0
        %626 = vmatpush2.msra.mxu0 0.0
        %627 = vmatprep.subr.mxu0 0.0
        %628 = vmatpush2.msra.mxu0 0.0
        %629 = vmatprep.subr.mxu0 0.0
        %630 = vmatpush2.msra.mxu0 0.0
        %631 = vmatprep.mubr.f32.mxu0 0.0
        %632 = vmatmul.mubr.f32.gmra.mxu0 %v535
        %v633 = vpop.f32.mrf.mxu0
        %v634 = vadd.f32 %v565, %v633
        %v635 = vpop.f32.mrf.mxu0
        %636 = vmatprep.mubr.f32.mxu0 0.0
        %637 = vmatmul.mubr.f32.gmra.mxu0 %v536
        %v638 = vpop.f32.mrf.mxu0
        %v639 = vadd.f32 %v565, %v638
        %v640 = vpop.f32.mrf.mxu0
        %641 = vmatprep.mubr.f32.mxu0 0.0
        %642 = vmatmul.mubr.f32.gmra.mxu0 %v537
        %v643 = vpop.f32.mrf.mxu0
        %v644 = vadd.f32 %v565, %v643
        %v645 = vpop.f32.mrf.mxu0
        %646 = vmatprep.mubr.f32.mxu0 0.0
        %647 = vmatmul.mubr.f32.gmra.mxu0 %v538
        %v648 = vpop.f32.mrf.mxu0
        %v649 = vadd.f32 %v565, %v648
        %v650 = vpop.f32.mrf.mxu0
        %651 = vmatprep.mubr.f32.mxu0 0.0
        %652 = vmatmul.mubr.f32.gmra.mxu0 %v539
        %v653 = vpop.f32.mrf.mxu0
        %v654 = vadd.f32 %v565, %v653
        %v655 = vpop.f32.mrf.mxu0
        %656 = vmatprep.mubr.f32.mxu0 0.0
        %657 = vmatmul.mubr.f32.gmra.mxu0 %v540
        %v658 = vpop.f32.mrf.mxu0
        %v659 = vadd.f32 %v565, %v658
        %v660 = vpop.f32.mrf.mxu0
        %661 = vmatprep.mubr.f32.mxu0 0.0
        %662 = vmatmul.mubr.f32.gmra.mxu0 %v541
        %v663 = vpop.f32.mrf.mxu0
        %v664 = vadd.f32 %v565, %v663
        %v665 = vpop.f32.mrf.mxu0
        %666 = vdwg.mxu0
        %v667 = vtanh.pop %v634
        %v668 = vtanh.pop %v639
        %v669 = vtanh.pop %v644
        %v670 = vtanh.pop %v649
        %v671 = vtanh.pop %v654
        %v672 = vtanh.pop %v659
        %v673 = vtanh.pop %v664
        %s674 = scalar_lea.vmem [#allocation2], 256
        %v675 = vld [vmem:[%s674] sm:$0xff]
        %v676 = vld [vmem:[%s674 + $0x8] sm:$0xff]
        %v677 = vld [vmem:[%s674 + $0x10] sm:$0xff]
        %v678 = vld [vmem:[%s674 + $0x18] sm:$0xff]
        %v679 = vld [vmem:[%s674 + $0x20] sm:$0xff]
        %v680 = vld [vmem:[%s674 + $0x28] sm:$0xff]
        %v681 = vld [vmem:[%s674 + $0x30] sm:$0xff]
        %v682 = vld [vmem:[%s674 + $0x38] sm:$0xff]
        %v683 = vld [vmem:[%s674 + $0x40] sm:$0xff]
        %v684 = vld [vmem:[%s674 + $0x48] sm:$0xff]
        %v685 = vld [vmem:[%s674 + $0x50] sm:$0xff]
        %v686 = vld [vmem:[%s674 + $0x58] sm:$0xff]
        %v687 = vld [vmem:[%s674 + $0x60] sm:$0xff]
        %v688 = vld [vmem:[%s674 + $0x68] sm:$0xff]
        %v689 = vld [vmem:[%s674 + $0x70] sm:$0xff]
        %v690 = vld [vmem:[%s674 + $0x78] sm:$0xff]
        %s691 = scalar_lea.vmem %s5, 2
        %v692 = vld [vmem:[%s691] sm:$0x1]
        %v694 = vlaneseq
        %v695 = vshrl.u32 %v694, 7
        %v696 = vsub.s32 0, %v695
        %v697 = vrot.slane %v692, %v696
        %699 = vmatprep.subr.mxu0 0.0
        %700 = vmatpush1.msra.mxu0 %v690
        %701 = vmatprep.subr.mxu0 0.0
        %702 = vmatpush1.msra.mxu0 %v689
        %703 = vmatprep.subr.mxu0 0.0
        %704 = vmatpush1.msra.mxu0 %v688
        %705 = vmatprep.subr.mxu0 0.0
        %706 = vmatpush1.msra.mxu0 %v687
        %707 = vmatprep.subr.mxu0 0.0
        %708 = vmatpush1.msra.mxu0 %v686
        %709 = vmatprep.subr.mxu0 0.0
        %710 = vmatpush1.msra.mxu0 %v685
        %711 = vmatprep.subr.mxu0 0.0
        %712 = vmatpush1.msra.mxu0 %v684
        %713 = vmatprep.subr.mxu0 0.0
        %714 = vmatpush1.msra.mxu0 %v683
        %715 = vmatprep.subr.mxu0 0.0
        %716 = vmatpush1.msra.mxu0 %v682
        %717 = vmatprep.subr.mxu0 0.0
        %718 = vmatpush1.msra.mxu0 %v681
        %719 = vmatprep.subr.mxu0 0.0
        %720 = vmatpush1.msra.mxu0 %v680
        %721 = vmatprep.subr.mxu0 0.0
        %722 = vmatpush1.msra.mxu0 %v679
        %723 = vmatprep.subr.mxu0 0.0
        %724 = vmatpush1.msra.mxu0 %v678
        %725 = vmatprep.subr.mxu0 0.0
        %726 = vmatpush1.msra.mxu0 %v677
        %727 = vmatprep.subr.mxu0 0.0
        %728 = vmatpush1.msra.mxu0 %v676
        %729 = vmatprep.subr.mxu0 0.0
        %730 = vmatpush1.msra.mxu0 %v675
        %731 = vmatprep.subr.mxu0 0.0
        %732 = vmatpush2.msra.mxu0 0.0
        %733 = vmatprep.subr.mxu0 0.0
        %734 = vmatpush2.msra.mxu0 0.0
        %735 = vmatprep.subr.mxu0 0.0
        %736 = vmatpush2.msra.mxu0 0.0
        %737 = vmatprep.subr.mxu0 0.0
        %738 = vmatpush2.msra.mxu0 0.0
        %739 = vmatprep.subr.mxu0 0.0
        %740 = vmatpush2.msra.mxu0 0.0
        %741 = vmatprep.subr.mxu0 0.0
        %742 = vmatpush2.msra.mxu0 0.0
        %743 = vmatprep.subr.mxu0 0.0
        %744 = vmatpush2.msra.mxu0 0.0
        %745 = vmatprep.subr.mxu0 0.0
        %746 = vmatpush2.msra.mxu0 0.0
        %747 = vmatprep.subr.mxu0 0.0
        %748 = vmatpush2.msra.mxu0 0.0
        %749 = vmatprep.subr.mxu0 0.0
        %750 = vmatpush2.msra.mxu0 0.0
        %751 = vmatprep.subr.mxu0 0.0
        %752 = vmatpush2.msra.mxu0 0.0
        %753 = vmatprep.subr.mxu0 0.0
        %754 = vmatpush2.msra.mxu0 0.0
        %755 = vmatprep.subr.mxu0 0.0
        %756 = vmatpush2.msra.mxu0 0.0
        %757 = vmatprep.subr.mxu0 0.0
        %758 = vmatpush2.msra.mxu0 0.0
        %759 = vmatprep.subr.mxu0 0.0
        %760 = vmatpush2.msra.mxu0 0.0
        %761 = vmatprep.subr.mxu0 0.0
        %762 = vmatpush2.msra.mxu0 0.0
        %763 = vmatprep.mubr.f32.mxu0 0.0
        %764 = vmatmul.mubr.f32.gmra.mxu0 %v667
        %v765 = vpop.f32.mrf.mxu0
        %v766 = vadd.f32 %v697, %v765
        %v767 = vpop.f32.mrf.mxu0
        %768 = vmatprep.mubr.f32.mxu0 0.0
        %769 = vmatmul.mubr.f32.gmra.mxu0 %v668
        %v770 = vpop.f32.mrf.mxu0
        %v771 = vadd.f32 %v697, %v770
        %v772 = vpop.f32.mrf.mxu0
        %773 = vmatprep.mubr.f32.mxu0 0.0
        %774 = vmatmul.mubr.f32.gmra.mxu0 %v669
        %v775 = vpop.f32.mrf.mxu0
        %v776 = vadd.f32 %v697, %v775
        %v777 = vpop.f32.mrf.mxu0
        %778 = vmatprep.mubr.f32.mxu0 0.0
        %779 = vmatmul.mubr.f32.gmra.mxu0 %v670
        %v780 = vpop.f32.mrf.mxu0
        %v781 = vadd.f32 %v697, %v780
        %v782 = vpop.f32.mrf.mxu0
        %783 = vmatprep.mubr.f32.mxu0 0.0
        %784 = vmatmul.mubr.f32.gmra.mxu0 %v671
        %v785 = vpop.f32.mrf.mxu0
        %v786 = vadd.f32 %v697, %v785
        %v787 = vpop.f32.mrf.mxu0
        %788 = vmatprep.mubr.f32.mxu0 0.0
        %789 = vmatmul.mubr.f32.gmra.mxu0 %v672
        %v790 = vpop.f32.mrf.mxu0
        %v791 = vadd.f32 %v697, %v790
        %v792 = vpop.f32.mrf.mxu0
        %793 = vmatprep.mubr.f32.mxu0 0.0
        %794 = vmatmul.mubr.f32.gmra.mxu0 %v673
        %v795 = vpop.f32.mrf.mxu0
        %v796 = vadd.f32 %v697, %v795
        %v797 = vpop.f32.mrf.mxu0
        %798 = vdwg.mxu0
        %v799 = vtanh.pop %v766
        %v800 = vtanh.pop %v771
        %v801 = vtanh.pop %v776
        %v802 = vtanh.pop %v781
        %v803 = vtanh.pop %v786
        %v804 = vtanh.pop %v791
        %v805 = vtanh.pop %v796
        %s806 = scalar_lea.vmem [#allocation2], 384
        %v807 = vld [vmem:[%s806] sm:$0xff]
        %v808 = vld [vmem:[%s806 + $0x8] sm:$0xff]
        %v809 = vld [vmem:[%s806 + $0x10] sm:$0xff]
        %v810 = vld [vmem:[%s806 + $0x18] sm:$0xff]
        %v811 = vld [vmem:[%s806 + $0x20] sm:$0xff]
        %v812 = vld [vmem:[%s806 + $0x28] sm:$0xff]
        %v813 = vld [vmem:[%s806 + $0x30] sm:$0xff]
        %v814 = vld [vmem:[%s806 + $0x38] sm:$0xff]
        %v815 = vld [vmem:[%s806 + $0x40] sm:$0xff]
        %v816 = vld [vmem:[%s806 + $0x48] sm:$0xff]
        %v817 = vld [vmem:[%s806 + $0x50] sm:$0xff]
        %v818 = vld [vmem:[%s806 + $0x58] sm:$0xff]
        %v819 = vld [vmem:[%s806 + $0x60] sm:$0xff]
        %v820 = vld [vmem:[%s806 + $0x68] sm:$0xff]
        %v821 = vld [vmem:[%s806 + $0x70] sm:$0xff]
        %v822 = vld [vmem:[%s806 + $0x78] sm:$0xff]
        %s823 = scalar_lea.vmem %s5, 3
        %v824 = vld [vmem:[%s823] sm:$0x1]
        %v826 = vlaneseq
        %v827 = vshrl.u32 %v826, 7
        %v828 = vsub.s32 0, %v827
        %v829 = vrot.slane %v824, %v828
        %831 = vmatprep.subr.mxu0 0.0
        %832 = vmatpush1.msra.mxu0 %v822
        %833 = vmatprep.subr.mxu0 0.0
        %834 = vmatpush1.msra.mxu0 %v821
        %835 = vmatprep.subr.mxu0 0.0
        %836 = vmatpush1.msra.mxu0 %v820
        %837 = vmatprep.subr.mxu0 0.0
        %838 = vmatpush1.msra.mxu0 %v819
        %839 = vmatprep.subr.mxu0 0.0
        %840 = vmatpush1.msra.mxu0 %v818
        %841 = vmatprep.subr.mxu0 0.0
        %842 = vmatpush1.msra.mxu0 %v817
        %843 = vmatprep.subr.mxu0 0.0
        %844 = vmatpush1.msra.mxu0 %v816
        %845 = vmatprep.subr.mxu0 0.0
        %846 = vmatpush1.msra.mxu0 %v815
        %847 = vmatprep.subr.mxu0 0.0
        %848 = vmatpush1.msra.mxu0 %v814
        %849 = vmatprep.subr.mxu0 0.0
        %850 = vmatpush1.msra.mxu0 %v813
        %851 = vmatprep.subr.mxu0 0.0
        %852 = vmatpush1.msra.mxu0 %v812
        %853 = vmatprep.subr.mxu0 0.0
        %854 = vmatpush1.msra.mxu0 %v811
        %855 = vmatprep.subr.mxu0 0.0
        %856 = vmatpush1.msra.mxu0 %v810
        %857 = vmatprep.subr.mxu0 0.0
        %858 = vmatpush1.msra.mxu0 %v809
        %859 = vmatprep.subr.mxu0 0.0
        %860 = vmatpush1.msra.mxu0 %v808
        %861 = vmatprep.subr.mxu0 0.0
        %862 = vmatpush1.msra.mxu0 %v807
        %863 = vmatprep.subr.mxu0 0.0
        %864 = vmatpush2.msra.mxu0 0.0
        %865 = vmatprep.subr.mxu0 0.0
        %866 = vmatpush2.msra.mxu0 0.0
        %867 = vmatprep.subr.mxu0 0.0
        %868 = vmatpush2.msra.mxu0 0.0
        %869 = vmatprep.subr.mxu0 0.0
        %870 = vmatpush2.msra.mxu0 0.0
        %871 = vmatprep.subr.mxu0 0.0
        %872 = vmatpush2.msra.mxu0 0.0
        %873 = vmatprep.subr.mxu0 0.0
        %874 = vmatpush2.msra.mxu0 0.0
        %875 = vmatprep.subr.mxu0 0.0
        %876 = vmatpush2.msra.mxu0 0.0
        %877 = vmatprep.subr.mxu0 0.0
        %878 = vmatpush2.msra.mxu0 0.0
        %879 = vmatprep.subr.mxu0 0.0
        %880 = vmatpush2.msra.mxu0 0.0
        %881 = vmatprep.subr.mxu0 0.0
        %882 = vmatpush2.msra.mxu0 0.0
        %883 = vmatprep.subr.mxu0 0.0
        %884 = vmatpush2.msra.mxu0 0.0
        %885 = vmatprep.subr.mxu0 0.0
        %886 = vmatpush2.msra.mxu0 0.0
        %887 = vmatprep.subr.mxu0 0.0
        %888 = vmatpush2.msra.mxu0 0.0
        %889 = vmatprep.subr.mxu0 0.0
        %890 = vmatpush2.msra.mxu0 0.0
        %891 = vmatprep.subr.mxu0 0.0
        %892 = vmatpush2.msra.mxu0 0.0
        %893 = vmatprep.subr.mxu0 0.0
        %894 = vmatpush2.msra.mxu0 0.0
        %895 = vmatprep.mubr.f32.mxu0 0.0
        %896 = vmatmul.mubr.f32.gmra.mxu0 %v799
        %v897 = vpop.f32.mrf.mxu0
        %v898 = vadd.f32 %v829, %v897
        %v899 = vpop.f32.mrf.mxu0
        %900 = vmatprep.mubr.f32.mxu0 0.0
        %901 = vmatmul.mubr.f32.gmra.mxu0 %v800
        %v902 = vpop.f32.mrf.mxu0
        %v903 = vadd.f32 %v829, %v902
        %v904 = vpop.f32.mrf.mxu0
        %905 = vmatprep.mubr.f32.mxu0 0.0
        %906 = vmatmul.mubr.f32.gmra.mxu0 %v801
        %v907 = vpop.f32.mrf.mxu0
        %v908 = vadd.f32 %v829, %v907
        %v909 = vpop.f32.mrf.mxu0
        %910 = vmatprep.mubr.f32.mxu0 0.0
        %911 = vmatmul.mubr.f32.gmra.mxu0 %v802
        %v912 = vpop.f32.mrf.mxu0
        %v913 = vadd.f32 %v829, %v912
        %v914 = vpop.f32.mrf.mxu0
        %915 = vmatprep.mubr.f32.mxu0 0.0
        %916 = vmatmul.mubr.f32.gmra.mxu0 %v803
        %v917 = vpop.f32.mrf.mxu0
        %v918 = vadd.f32 %v829, %v917
        %v919 = vpop.f32.mrf.mxu0
        %920 = vmatprep.mubr.f32.mxu0 0.0
        %921 = vmatmul.mubr.f32.gmra.mxu0 %v804
        %v922 = vpop.f32.mrf.mxu0
        %v923 = vadd.f32 %v829, %v922
        %v924 = vpop.f32.mrf.mxu0
        %925 = vmatprep.mubr.f32.mxu0 0.0
        %926 = vmatmul.mubr.f32.gmra.mxu0 %v805
        %v927 = vpop.f32.mrf.mxu0
        %v928 = vadd.f32 %v829, %v927
        %v929 = vpop.f32.mrf.mxu0
        %930 = vdwg.mxu0
        %v931 = vtanh.pop %v898
        %v932 = vtanh.pop %v903
        %v933 = vtanh.pop %v908
        %v934 = vtanh.pop %v913
        %v935 = vtanh.pop %v918
        %v936 = vtanh.pop %v923
        %v937 = vtanh.pop %v928
        %v938 = vld [vmem:[%s6] sm:$0x3]
        %v939 = vld [vmem:[%s7] sm:$0x3]
        %941 = vset.pattern.permute.xlu0 0
        %942 = vperm.xlu0 %941, %v939
        %v943 = vpop.permute.xlu0 %942
        %945 = vmatprep.subr.mxu0 0.0
        %946 = vmatpush1.xpose.msra.mxu0 0.0
        %947 = vmatprep.subr.mxu0 0.0
        %948 = vmatpush1.xpose.msra.mxu0 0.0
        %949 = vmatprep.subr.mxu0 0.0
        %950 = vmatpush1.xpose.msra.mxu0 0.0
        %951 = vmatprep.subr.mxu0 0.0
        %952 = vmatpush1.xpose.msra.mxu0 0.0
        %953 = vmatprep.subr.mxu0 0.0
        %954 = vmatpush1.xpose.msra.mxu0 0.0
        %955 = vmatprep.subr.mxu0 0.0
        %956 = vmatpush1.xpose.msra.mxu0 0.0
        %957 = vmatprep.subr.mxu0 0.0
        %958 = vmatpush1.xpose.msra.mxu0 0.0
        %959 = vmatprep.subr.mxu0 0.0
        %960 = vmatpush1.xpose.msra.mxu0 0.0
        %961 = vmatprep.subr.mxu0 0.0
        %962 = vmatpush1.xpose.msra.mxu0 0.0
        %963 = vmatprep.subr.mxu0 0.0
        %964 = vmatpush1.xpose.msra.mxu0 %v937
        %965 = vmatprep.subr.mxu0 0.0
        %966 = vmatpush1.xpose.msra.mxu0 %v936
        %967 = vmatprep.subr.mxu0 0.0
        %968 = vmatpush1.xpose.msra.mxu0 %v935
        %969 = vmatprep.subr.mxu0 0.0
        %970 = vmatpush1.xpose.msra.mxu0 %v934
        %971 = vmatprep.subr.mxu0 0.0
        %972 = vmatpush1.xpose.msra.mxu0 %v933
        %973 = vmatprep.subr.mxu0 0.0
        %974 = vmatpush1.xpose.msra.mxu0 %v932
        %975 = vmatprep.subr.mxu0 0.0
        %976 = vmatpush1.xpose.msra.mxu0 %v931
        %977 = vmatprep.subr.mxu0 0.0
        %978 = vmatpush2.xpose.msra.mxu0 0.0
        %979 = vmatprep.subr.mxu0 0.0
        %980 = vmatpush2.xpose.msra.mxu0 0.0
        %981 = vmatprep.subr.mxu0 0.0
        %982 = vmatpush2.xpose.msra.mxu0 0.0
        %983 = vmatprep.subr.mxu0 0.0
        %984 = vmatpush2.xpose.msra.mxu0 0.0
        %985 = vmatprep.subr.mxu0 0.0
        %986 = vmatpush2.xpose.msra.mxu0 0.0
        %987 = vmatprep.subr.mxu0 0.0
        %988 = vmatpush2.xpose.msra.mxu0 0.0
        %989 = vmatprep.subr.mxu0 0.0
        %990 = vmatpush2.xpose.msra.mxu0 0.0
        %991 = vmatprep.subr.mxu0 0.0
        %992 = vmatpush2.xpose.msra.mxu0 0.0
        %993 = vmatprep.subr.mxu0 0.0
        %994 = vmatpush2.xpose.msra.mxu0 0.0
        %995 = vmatprep.subr.mxu0 0.0
        %996 = vmatpush2.xpose.msra.mxu0 0.0
        %997 = vmatprep.subr.mxu0 0.0
        %998 = vmatpush2.xpose.msra.mxu0 0.0
        %999 = vmatprep.subr.mxu0 0.0
        %1000 = vmatpush2.xpose.msra.mxu0 0.0
        %1001 = vmatprep.subr.mxu0 0.0
        %1002 = vmatpush2.xpose.msra.mxu0 0.0
        %1003 = vmatprep.subr.mxu0 0.0
        %1004 = vmatpush2.xpose.msra.mxu0 0.0
        %1005 = vmatprep.subr.mxu0 0.0
        %1006 = vmatpush2.xpose.msra.mxu0 0.0
        %1007 = vmatprep.subr.mxu0 0.0
        %1008 = vmatpush2.xpose.msra.mxu0 0.0
        %1009 = vmatprep.mubr.f32.mxu0 0.0
        %1010 = vmatmul.mubr.f32.gmra.mxu0 %v938
        %v1011 = vpop.f32.mrf.mxu0
        %v1012 = vadd.f32 %v943, %v1011
        %v1013 = vpop.f32.mrf.mxu0
        %1014 = vdwg.mxu0
        %v1015 = vld [vmem:[%s330] sm:$0x1]
        %v1016 = vsub.f32 1.0, %v1015
        %v1017 = vmul.f32 %v1015, %v1016
        %v1018 = vlaneseq
        %v1019 = vshrl.u32 %v1018, 7
        %vm1020 = vcmp.eq.s32.totalorder %v1019, 0
        %v1022 = vlaneseq
        %v1023 = vshrl.u32 %v1022, 7
        %v1024 = vsub.s32 0, %v1023
        %v1025 = vrot.slane %v1017, %v1024
        %v1027 = vmul.f32 %v1012, %v1025
        %v1028 = vsel %vm1020, %v1027, %v1012
        %vm1029 = vcmask 451584
        %1030 = vst.msk [vmem:[%s334] sm:$0x3] %vm1029, %v1028
        %p1031 = scmp.lt.s32.totalorder %s20, 1
        %s1032 = scalar_select %p1031, %s20, 1
        %s1033 = smul.addr %s1032, 2
        %s1034 = scalar_lea.vmem %s8, %s1033
        // Predicated region
        $region57: #{neural_network_forward.1} parent=51 // pred_check
          %p1035 = pneg %p216
        $region58: #{neural_network_forward.1} parent=51 // pred_check_branch
          %1037 = sbr.rel (%p1035) target = $region60
        $region59: #{neural_network_forward.1} parent=51 // pred_region
          _
        $region60: #{neural_network_forward.1} parent=51 // pred_fallthru
          _
      $region52: #{neural_network_forward.1} parent=5 // pred_fallthru
        _
      %p1038 = scmp.le.s32.totalorder 2, %s15
      // Predicated region
      $region61: #{neural_network_forward.1} parent=5 // pred_check
        %p1039 = pneg %p1038
      $region62: #{neural_network_forward.1} parent=5 // pred_check_branch
        %1041 = sbr.rel (%p1039) target = $region64
      $region63: #{neural_network_forward.1} parent=5 // pred_region
        %s1042 = ssub.s32 %s15, 2
        // Predicated region
        $region65: #{neural_network_forward.1} parent=63 // pred_check
          %p1043 = pneg %p222
        $region66: #{neural_network_forward.1} parent=63 // pred_check_branch
          %1045 = sbr.rel (%p1043) target = $region68
        $region67: #{neural_network_forward.1} parent=63 // pred_region
          %p1046 = scmp.lt.s32.totalorder %s21, 1
          %s1047 = scalar_select %p1046, %s21, 1
          %s1048 = smul.addr %s1047, 2
          %s1049 = scalar_lea.vmem %s8, %s1048
        $region68: #{neural_network_forward.1} parent=63 // pred_fallthru
          _
      $region64: #{neural_network_forward.1} parent=5 // pred_fallthru
        _
    $region6: #{neural_network_forward.1} parent=1 // loop_footer
      %s19 = sadd.s32 1, %s15
    $region7: #{neural_network_forward.1} parent=1 // loop_footer_branch
      %14 = sbr.rel target = $region3
    $region8: #{neural_network_forward.1} parent=1 // loop_exit
      _
    %1050 = vsyncpa [#allocation3], 1
    %s1051 = scalar_lea.sflag [#allocation3], 1
    %1052 = vsyncpa %s1051, 1

</llo_original>
